<compile_context>
chip_gen: v5e
topology: v5e:2x2
jax: 0.10.0
libtpu: 0.0.40
codegen_flags: <defaults>
</compile_context>

<pallas_src>
import jax
import jax.numpy as jnp
from jax.experimental import pallas as pl
from jax.experimental.pallas import tpu as pltpu

_LANE = 128      # lane width (last-dim granularity)
_SUBLANE = 8     # f32 sublane width (second-to-last-dim granularity)


def _round_up(n, m):
    return ((n + m - 1) // m) * m


def _pad2(a, rows, cols):
    pr, pc = rows - a.shape[0], cols - a.shape[1]
    if pr == 0 and pc == 0:
        return a               # already aligned: no extra HBM round trip
    return jnp.pad(a, ((0, pr), (0, pc)))


# -----------------------------------------------------------------------------
# Kernels
# -----------------------------------------------------------------------------
def _mlp2_kernel_simple(x_ref, w1_ref, b1_ref, w2_ref, b2_ref, o_ref):
    """Weights fully VMEM-resident; grid over the batch only."""
    h = jnp.dot(x_ref[...], w1_ref[...], preferred_element_type=jnp.float32)
    h = jnp.maximum(h + b1_ref[...], 0.0)                     # (tb, idim_p) f32
    out = jnp.dot(h.astype(w2_ref.dtype), w2_ref[...],
                  preferred_element_type=jnp.float32)
    o_ref[...] = (out + b2_ref[...]).astype(o_ref.dtype)      # lane-dense store


def _mlp2_kernel_tiled(x_ref, w1_ref, b1_ref, w2_ref, b2_ref, o_ref, acc_ref):
    """Hidden dimension tiled (grid axis 1, 'arbitrary'); f32 accumulator."""
    hk = pl.program_id(1)

    @pl.when(hk == 0)
    def _init():
        acc_ref[...] = jnp.zeros_like(acc_ref)

    hid = jnp.dot(x_ref[...], w1_ref[...], preferred_element_type=jnp.float32)
    hid = jnp.maximum(hid + b1_ref[...], 0.0)                  # (tb, th) f32
    acc_ref[...] += jnp.dot(hid.astype(w2_ref.dtype), w2_ref[...],
                            preferred_element_type=jnp.float32)

    @pl.when(hk == pl.num_programs(1) - 1)
    def _finalize():
        o_ref[...] = (acc_ref[...] + b2_ref[...]).astype(o_ref.dtype)


# -----------------------------------------------------------------------------
# Parameter packing (hoisted out of the per-call hot path: do this once)
# -----------------------------------------------------------------------------
def pack_mlp2_params(w1, b1, w2, b2, *, compute_dtype=jnp.bfloat16):
    """Pad input/hidden/class dims to 128-lane multiples, cast to MXU dtype.

    Weights use (in_features, out_features) layout (transpose of
    torch.nn.Linear.weight).  Zero padding is numerically exact: padded hidden
    units give relu(0) = 0 and padded class columns are sliced off.
    """
    idim = w1.shape[0]
    nclasses = w2.shape[1]
    assert w1.shape == (idim, idim) and b1.shape == (idim,)
    assert w2.shape == (idim, nclasses) and b2.shape == (nclasses,)

    idim_p = _round_up(idim, _LANE)
    ncls_p = _round_up(nclasses, _LANE)
    # TODO(synk): on v7x, compute_dtype=jnp.float8_e4m3fn would halve weight
    # VMEM/HBM bytes and ~double MXU throughput when the accuracy budget allows.
    return dict(
        w1=_pad2(w1, idim_p, idim_p).astype(compute_dtype),
        b1=_pad2(b1.reshape(1, -1), 1, idim_p).astype(jnp.float32),
        w2=_pad2(w2, idim_p, ncls_p).astype(compute_dtype),
        b2=_pad2(b2.reshape(1, -1), 1, ncls_p).astype(jnp.float32),
        idim=idim, nclasses=nclasses, idim_p=idim_p, ncls_p=ncls_p,
    )


def _vmem_capacity_bytes():
    # Per-TensorCore VMEM (v5e/v6e: 128 MiB, v7x: 64 MiB).  Fall back to the
    # smallest (v7x) value if the query is unavailable.
    try:
        return int(pltpu.get_tpu_info().vmem_capacity_bytes)
    except Exception:
        return 64 << 20


# -----------------------------------------------------------------------------
# Forward
# -----------------------------------------------------------------------------
def mlp2_apply(x, params, *, tb=None, th=None, force_tiled=False):
    """relu(x @ W1 + b1) @ W2 + b2 with pre-packed params (pack_mlp2_params)."""
    idim, nclasses = params["idim"], params["nclasses"]
    idim_p, ncls_p = params["idim_p"], params["ncls_p"]
    w1p, b1p, w2p, b2p = params["w1"], params["b1"], params["w2"], params["b2"]

    lead_shape = x.shape[:-1]
    assert x.shape[-1] == idim
    x2 = x.reshape(-1, idim)
    B = x2.shape[0]

    out_dtype = x.dtype                      # store kernel output in x.dtype
    out_bytes = jnp.dtype(out_dtype).itemsize
    cbytes = jnp.dtype(w1p.dtype).itemsize   # MXU operand bytes (bf16 -> 2)

    vmem_cap = _vmem_capacity_bytes()
    budget = vmem_cap - (12 << 20)           # compiler scratch + DMA headroom

    # Resident footprints.  Grid-invariant weights are single-buffered
    # (constant index map -> no re-DMA, no second buffer), wbuf tracks the
    # fallback where default double-buffering is used.
    def simple_vmem(tb_, wbuf=1):
        return (wbuf * ((idim_p * idim_p + idim_p * ncls_p) * cbytes
                        + _SUBLANE * (idim_p + ncls_p) * 4)     # W1/W2 + biases
                + 2 * tb_ * idim_p * cbytes                     # x tile (2 bufs)
                + 2 * tb_ * ncls_p * out_bytes                  # out tile (2 bufs)
                + tb_ * idim_p * 4                              # hidden (f32)
                + tb_ * idim_p * cbytes                         # hidden -> MXU dtype
                + tb_ * ncls_p * 4)                             # f32 out pre-cast

    def tiled_vmem(tb_, th_, wbuf=1):
        return (2 * tb_ * idim_p * cbytes                       # x tile
                + 2 * idim_p * th_ * cbytes                     # W1 block
                + 2 * _SUBLANE * th_ * 4                        # b1 block
                + 2 * th_ * ncls_p * cbytes                     # W2 block
                + wbuf * _SUBLANE * ncls_p * 4                  # b2 (resident)
                + 2 * tb_ * ncls_p * out_bytes                  # out tile
                + tb_ * ncls_p * 4                              # f32 accumulator
                + tb_ * th_ * 4 + tb_ * th_ * cbytes)           # hidden slice

    # Batch tile: big tiles in the streaming regime, >= 2 grid steps whenever
    # B allows (software pipelining + megacore / 2-TC sharding), multiples of
    # 16 for bf16 sublane packing.
    if tb is None:
        if B >= 1024:
            tb = 512
        elif B >= 512:
            tb = 256
        elif B >= 32:
            tb = _round_up(-(-B // 2), 16)
        else:
            tb = _round_up(max(B, 1), 16)
        while tb > 16 and tiled_vmem(tb, min(512, idim_p)) > budget:
            tb = max(16, _round_up(tb // 2, 16))
    B_p = _round_up(B, tb)
    grid_b = B_p // tb

    use_simple = (not force_tiled) and simple_vmem(tb) <= budget

    # Pad / cast the activations (weights were pre-packed once, outside).
    xp = _pad2(x2, B_p, idim_p).astype(w1p.dtype)
    # TODO(synk): cast x to the MXU dtype at the producer (or use
    # CompilerParams(allow_input_fusion=...)) to avoid this extra HBM pass.

    def _build_and_call(weight_mode):
        wbuf = 1 if weight_mode is not None else 2
        if use_simple:
            needed = simple_vmem(tb, wbuf)
            grid = (grid_b,)
            in_specs = [
                pl.BlockSpec((tb, idim_p), lambda i: (i, 0)),              # x tile
                pl.BlockSpec((idim_p, idim_p), lambda i: (0, 0),
                             pipeline_mode=weight_mode),                   # W1
                pl.BlockSpec((1, idim_p), lambda i: (0, 0),
                             pipeline_mode=weight_mode),                   # b1
                pl.BlockSpec((idim_p, ncls_p), lambda i: (0, 0),
                             pipeline_mode=weight_mode),                   # W2
                pl.BlockSpec((1, ncls_p), lambda i: (0, 0),
                             pipeline_mode=weight_mode),                   # b2
            ]
            out_spec = pl.BlockSpec((tb, ncls_p), lambda i: (i, 0))
            scratch = []
            kernel = _mlp2_kernel_simple
            semantics = ("parallel",)
        else:
            # Hidden-dim tiling: th is a multiple of 128 that divides idim_p
            # and fits the budget; removes the idim VMEM ceiling (v7x 64 MiB).
            n_lanes = idim_p // _LANE
            d = max(1, min((th or 512) // _LANE, n_lanes))
            while d > 1 and (n_lanes % d != 0
                             or tiled_vmem(tb, d * _LANE, wbuf) > budget):
                d -= 1
            th_ = d * _LANE
            needed = tiled_vmem(tb, th_, wbuf)
            grid = (grid_b, idim_p // th_)
            in_specs = [
                pl.BlockSpec((tb, idim_p), lambda i, h: (i, 0)),           # x tile
                pl.BlockSpec((idim_p, th_), lambda i, h: (0, h)),          # W1 blk
                pl.BlockSpec((1, th_), lambda i, h: (0, h)),               # b1 blk
                pl.BlockSpec((th_, ncls_p), lambda i, h: (h, 0)),          # W2 blk
                pl.BlockSpec((1, ncls_p), lambda i, h: (0, 0),
                             pipeline_mode=weight_mode),                   # b2
            ]
            out_spec = pl.BlockSpec((tb, ncls_p), lambda i, h: (i, 0))
            scratch = [pltpu.VMEM((tb, ncls_p), jnp.float32)]
            kernel = _mlp2_kernel_tiled
            semantics = ("parallel", "arbitrary")

        vmem_limit = int(min(vmem_cap - (1 << 20),
                             max(needed + (6 << 20), 32 << 20)))
        return pl.pallas_call(
            kernel,
            out_shape=jax.ShapeDtypeStruct((B_p, ncls_p), out_dtype),
            grid=grid,
            in_specs=in_specs,
            out_specs=out_spec,
            scratch_shapes=scratch,
            compiler_params=pltpu.CompilerParams(
                dimension_semantics=semantics,
                vmem_limit_bytes=vmem_limit),
        )(xp, w1p, b1p, w2p, b2p)

    try:
        # Single-buffer the grid-invariant weights/biases (halves their VMEM).
        out_p = _build_and_call(pl.Buffered(1))
    except Exception:
        # Fallback if Buffered(1) is unsupported on this jax/libtpu version.
        out_p = _build_and_call(None)

    return out_p[:B, :nclasses].reshape(*lead_shape, nclasses)


def mlp2_forward(x, w1, b1, w2, b2, *, compute_dtype=jnp.bfloat16, **kw):
    """Convenience wrapper (prefer pack_mlp2_params once + mlp2_apply per call)."""
    return mlp2_apply(
        x, pack_mlp2_params(w1, b1, w2, b2, compute_dtype=compute_dtype), **kw)


if __name__ == "__main__":
    key = jax.random.PRNGKey(0)

    def make_inputs(k, batch, idim, nclasses):
        kx, kw1, kb1, kw2, kb2 = jax.random.split(k, 5)
        bound = 1.0 / (idim ** 0.5)           # PyTorch Linear init bound
        x = jax.random.normal(kx, (batch, idim), dtype=jnp.float32)
        w1 = jax.random.uniform(kw1, (idim, idim), jnp.float32, -bound, bound)
        b1 = jax.random.uniform(kb1, (idim,), jnp.float32, -bound, bound)
        w2 = jax.random.uniform(kw2, (idim, nclasses), jnp.float32, -bound, bound)
        b2 = jax.random.uniform(kb2, (nclasses,), jnp.float32, -bound, bound)
        return x, w1, b1, w2, b2

    k1, k2 = jax.random.split(key)

    # 1) Small shapes consistent with MLP2Layers(idim, nclasses): resident path.
    x, w1, b1, w2, b2 = make_inputs(k1, batch=16, idim=32, nclasses=16)
    params = pack_mlp2_params(w1, b1, w2, b2)          # pack once, reuse
    out = jax.block_until_ready(mlp2_apply(x, params))
    ref = jnp.maximum(x @ w1 + b1, 0.0) @ w2 + b2
    assert out.shape == (16, 16)
    assert jnp.allclose(out, ref, atol=3e-2, rtol=3e-2), "simple path mismatch"

    # 2) Exercise the hidden-dim tiled / accumulator path (2 hidden tiles,
    #    2 batch tiles) that large idim would trigger automatically on v7x.
    x, w1, b1, w2, b2 = make_inputs(k2, batch=64, idim=256, nclasses=10)
    params = pack_mlp2_params(w1, b1, w2, b2)
    out = jax.block_until_ready(mlp2_apply(x, params, th=128, force_tiled=True))
    ref = jnp.maximum(x @ w1 + b1, 0.0) @ w2 + b2
    assert out.shape == (64, 10)
    assert jnp.allclose(out, ref, atol=3e-2, rtol=3e-2), "tiled path mismatch"

    print("KERNEL_OK")
</pallas_src>

<mosaic_0001>
module attributes {stable_mosaic.version = 11 : i64} {
  func.func @_mlp2_kernel_simple(%arg0: i32, %arg1: memref<16x128xbf16, #tpu.memory_space<vmem>>, %arg2: memref<128x128xbf16, #tpu.memory_space<vmem>>, %arg3: memref<1x128xf32, #tpu.memory_space<vmem>>, %arg4: memref<128x128xbf16, #tpu.memory_space<vmem>>, %arg5: memref<1x128xf32, #tpu.memory_space<vmem>>, %arg6: memref<16x128xf32, #tpu.memory_space<vmem>>) attributes {dimension_semantics = [#tpu.dimension_semantics<parallel>], iteration_bounds = array<i64: 1>, scalar_prefetch = 0 : i64, scratch_operands = 0 : i64, tpu.core_type = #tpu.core_type<tc>, window_params = [{transform_indices = @transform_0, window_bounds = array<i64: 16, 128>}, {pipeline_mode = #tpu.pipeline_mode<synchronous>, transform_indices = @transform_1, window_bounds = array<i64: 128, 128>}, {pipeline_mode = #tpu.pipeline_mode<synchronous>, transform_indices = @transform_2, window_bounds = array<i64: 1, 128>}, {pipeline_mode = #tpu.pipeline_mode<synchronous>, transform_indices = @transform_3, window_bounds = array<i64: 128, 128>}, {pipeline_mode = #tpu.pipeline_mode<synchronous>, transform_indices = @transform_4, window_bounds = array<i64: 1, 128>}, {transform_indices = @transform_5, window_bounds = array<i64: 16, 128>}]} {
    %c0 = arith.constant 0 : index
    %c0_0 = arith.constant 0 : index
    %0 = vector.load %arg1[%c0, %c0_0] : memref<16x128xbf16, #tpu.memory_space<vmem>>, vector<16x128xbf16>
    %c0_1 = arith.constant 0 : index
    %c0_2 = arith.constant 0 : index
    %1 = vector.load %arg2[%c0_1, %c0_2] : memref<128x128xbf16, #tpu.memory_space<vmem>>, vector<128x128xbf16>
    %cst = arith.constant dense<0.000000e+00> : vector<16x128xf32>
    %2 = tpu.matmul %0, %1, %cst {dimension_numbers = #tpu.dot_dimension_numbers<[1], [0], [0], [1], [0, 0, 1, 1], [], []>} : vector<16x128xbf16>, vector<128x128xbf16>, vector<16x128xf32> -> vector<16x128xf32>
    %c0_3 = arith.constant 0 : index
    %c0_4 = arith.constant 0 : index
    %3 = vector.load %arg3[%c0_3, %c0_4] : memref<1x128xf32, #tpu.memory_space<vmem>>, vector<1x128xf32>
    %4 = vector.broadcast %3 : vector<1x128xf32> to vector<16x128xf32>
    %5 = arith.addf %2, %4 : vector<16x128xf32>
    %cst_5 = arith.constant 0.000000e+00 : f32
    %6 = vector.broadcast %cst_5 : f32 to vector<16x128xf32>
    %7 = arith.maximumf %5, %6 : vector<16x128xf32>
    %8 = arith.truncf %7 : vector<16x128xf32> to vector<16x128xbf16>
    %c0_6 = arith.constant 0 : index
    %c0_7 = arith.constant 0 : index
    %9 = vector.load %arg4[%c0_6, %c0_7] : memref<128x128xbf16, #tpu.memory_space<vmem>>, vector<128x128xbf16>
    %cst_8 = arith.constant dense<0.000000e+00> : vector<16x128xf32>
    %10 = tpu.matmul %8, %9, %cst_8 {dimension_numbers = #tpu.dot_dimension_numbers<[1], [0], [0], [1], [0, 0, 1, 1], [], []>} : vector<16x128xbf16>, vector<128x128xbf16>, vector<16x128xf32> -> vector<16x128xf32>
    %c0_9 = arith.constant 0 : index
    %c0_10 = arith.constant 0 : index
    %11 = vector.load %arg5[%c0_9, %c0_10] : memref<1x128xf32, #tpu.memory_space<vmem>>, vector<1x128xf32>
    %12 = vector.broadcast %11 : vector<1x128xf32> to vector<16x128xf32>
    %13 = arith.addf %10, %12 : vector<16x128xf32>
    %c0_11 = arith.constant 0 : index
    %c0_12 = arith.constant 0 : index
    %14 = vector.load %arg6[%c0_11, %c0_12] : memref<16x128xf32, #tpu.memory_space<vmem>>, vector<16x128xf32>
    tpu.vector_store %arg6[%c0_11, %c0_12], %13 {strides = array<i32>} : memref<16x128xf32, #tpu.memory_space<vmem>>, vector<16x128xf32>,
    return
  }
  func.func @transform_0(%arg0: i32) -> (i32, i32) {
    %c0_i32 = arith.constant 0 : i32
    %c0_i32_0 = arith.constant 0 : i32
    return %arg0, %c0_i32 : i32, i32
  }
  func.func @transform_1(%arg0: i32) -> (i32, i32) {
    %c0_i32 = arith.constant 0 : i32
    %c0_i32_0 = arith.constant 0 : i32
    %c0_i32_1 = arith.constant 0 : i32
    return %c0_i32, %c0_i32_0 : i32, i32
  }
  func.func @transform_2(%arg0: i32) -> (i32, i32) {
    %c0_i32 = arith.constant 0 : i32
    %c0_i32_0 = arith.constant 0 : i32
    %c0_i32_1 = arith.constant 0 : i32
    return %c0_i32, %c0_i32_0 : i32, i32
  }
  func.func @transform_3(%arg0: i32) -> (i32, i32) {
    %c0_i32 = arith.constant 0 : i32
    %c0_i32_0 = arith.constant 0 : i32
    %c0_i32_1 = arith.constant 0 : i32
    return %c0_i32, %c0_i32_0 : i32, i32
  }
  func.func @transform_4(%arg0: i32) -> (i32, i32) {
    %c0_i32 = arith.constant 0 : i32
    %c0_i32_0 = arith.constant 0 : i32
    %c0_i32_1 = arith.constant 0 : i32
    return %c0_i32, %c0_i32_0 : i32, i32
  }
  func.func @transform_5(%arg0: i32) -> (i32, i32) {
    %c0_i32 = arith.constant 0 : i32
    %c0_i32_0 = arith.constant 0 : i32
    return %arg0, %c0_i32 : i32, i32
  }
}

module attributes {stable_mosaic.version = 11 : i64} {
  func.func @_mlp2_kernel_simple(%arg0: i32, %arg1: memref<16x128xbf16, #tpu.memory_space<vmem>>, %arg2: memref<128x128xbf16, #tpu.memory_space<vmem>>, %arg3: memref<1x128xf32, #tpu.memory_space<vmem>>, %arg4: memref<128x128xbf16, #tpu.memory_space<vmem>>, %arg5: memref<1x128xf32, #tpu.memory_space<vmem>>, %arg6: memref<16x128xf32, #tpu.memory_space<vmem>>) attributes {dimension_semantics = [#tpu.dimension_semantics<parallel>], iteration_bounds = array<i64: 1>, scalar_prefetch = 0 : i64, scratch_operands = 0 : i64, tpu.core_type = #tpu.core_type<tc>, window_params = [{transform_indices = @transform_0, window_bounds = array<i64: 16, 128>}, {pipeline_mode = #tpu.pipeline_mode<synchronous>, transform_indices = @transform_1, window_bounds = array<i64: 128, 128>}, {pipeline_mode = #tpu.pipeline_mode<synchronous>, transform_indices = @transform_2, window_bounds = array<i64: 1, 128>}, {pipeline_mode = #tpu.pipeline_mode<synchronous>, transform_indices = @transform_3, window_bounds = array<i64: 128, 128>}, {pipeline_mode = #tpu.pipeline_mode<synchronous>, transform_indices = @transform_4, window_bounds = array<i64: 1, 128>}, {transform_indices = @transform_5, window_bounds = array<i64: 16, 128>}]} {
    %c0 = arith.constant 0 : index
    %c0_0 = arith.constant 0 : index
    %0 = vector.load %arg1[%c0, %c0_0] : memref<16x128xbf16, #tpu.memory_space<vmem>>, vector<16x128xbf16>
    %c0_1 = arith.constant 0 : index
    %c0_2 = arith.constant 0 : index
    %1 = vector.load %arg2[%c0_1, %c0_2] : memref<128x128xbf16, #tpu.memory_space<vmem>>, vector<128x128xbf16>
    %cst = arith.constant dense<0.000000e+00> : vector<16x128xf32>
    %2 = tpu.matmul %0, %1, %cst {dimension_numbers = #tpu.dot_dimension_numbers<[1], [0], [0], [1], [0, 0, 1, 1], [], []>} : vector<16x128xbf16>, vector<128x128xbf16>, vector<16x128xf32> -> vector<16x128xf32>
    %c0_3 = arith.constant 0 : index
    %c0_4 = arith.constant 0 : index
    %3 = vector.load %arg3[%c0_3, %c0_4] : memref<1x128xf32, #tpu.memory_space<vmem>>, vector<1x128xf32>
    %4 = vector.broadcast %3 : vector<1x128xf32> to vector<16x128xf32>
    %5 = arith.addf %2, %4 : vector<16x128xf32>
    %cst_5 = arith.constant 0.000000e+00 : f32
    %6 = vector.broadcast %cst_5 : f32 to vector<16x128xf32>
    %7 = arith.maximumf %5, %6 : vector<16x128xf32>
    %8 = arith.truncf %7 : vector<16x128xf32> to vector<16x128xbf16>
    %c0_6 = arith.constant 0 : index
    %c0_7 = arith.constant 0 : index
    %9 = vector.load %arg4[%c0_6, %c0_7] : memref<128x128xbf16, #tpu.memory_space<vmem>>, vector<128x128xbf16>
    %cst_8 = arith.constant dense<0.000000e+00> : vector<16x128xf32>
    %10 = tpu.matmul %8, %9, %cst_8 {dimension_numbers = #tpu.dot_dimension_numbers<[1], [0], [0], [1], [0, 0, 1, 1], [], []>} : vector<16x128xbf16>, vector<128x128xbf16>, vector<16x128xf32> -> vector<16x128xf32>
    %c0_9 = arith.constant 0 : index
    %c0_10 = arith.constant 0 : index
    %11 = vector.load %arg5[%c0_9, %c0_10] : memref<1x128xf32, #tpu.memory_space<vmem>>, vector<1x128xf32>
    %12 = vector.broadcast %11 : vector<1x128xf32> to vector<16x128xf32>
    %13 = arith.addf %10, %12 : vector<16x128xf32>
    %c0_11 = arith.constant 0 : index
    %c0_12 = arith.constant 0 : index
    %14 = vector.load %arg6[%c0_11, %c0_12] : memref<16x128xf32, #tpu.memory_space<vmem>>, vector<16x128xf32>
    tpu.vector_store %arg6[%c0_11, %c0_12], %13 {strides = array<i32>} : memref<16x128xf32, #tpu.memory_space<vmem>>, vector<16x128xf32>,
    return
  }
  func.func @transform_0(%arg0: i32) -> (i32, i32) {
    %c0_i32 = arith.constant 0 : i32
    %c0_i32_0 = arith.constant 0 : i32
    return %arg0, %c0_i32 : i32, i32
  }
  func.func @transform_1(%arg0: i32) -> (i32, i32) {
    %c0_i32 = arith.constant 0 : i32
    %c0_i32_0 = arith.constant 0 : i32
    %c0_i32_1 = arith.constant 0 : i32
    return %c0_i32, %c0_i32_0 : i32, i32
  }
  func.func @transform_2(%arg0: i32) -> (i32, i32) {
    %c0_i32 = arith.constant 0 : i32
    %c0_i32_0 = arith.constant 0 : i32
    %c0_i32_1 = arith.constant 0 : i32
    return %c0_i32, %c0_i32_0 : i32, i32
  }
  func.func @transform_3(%arg0: i32) -> (i32, i32) {
    %c0_i32 = arith.constant 0 : i32
    %c0_i32_0 = arith.constant 0 : i32
    %c0_i32_1 = arith.constant 0 : i32
    return %c0_i32, %c0_i32_0 : i32, i32
  }
  func.func @transform_4(%arg0: i32) -> (i32, i32) {
    %c0_i32 = arith.constant 0 : i32
    %c0_i32_0 = arith.constant 0 : i32
    %c0_i32_1 = arith.constant 0 : i32
    return %c0_i32, %c0_i32_0 : i32, i32
  }
  func.func @transform_5(%arg0: i32) -> (i32, i32) {
    %c0_i32 = arith.constant 0 : i32
    %c0_i32_0 = arith.constant 0 : i32
    return %arg0, %c0_i32 : i32, i32
  }
}

</mosaic_0001>

<llo_original>
// kernel: tpu_custom_call.1
$region0: #{tpu_custom_call.1}
  #allocation0 [shape = 'u32[]', space=smem, size = 0x4, offset = 0x4, fixed_abs, tag = 'smem constant byte address 0x4 - core index']
  #allocation1 [shape = 'u32[72,128]{1,0:T(1,128)}', space=vmem, size = 0x9000, scoped, tag = 'internal scratch']
  %s0 = inlined_call_operand.hbm [shape: bf16[16,128], index: 0, kind: input, shape index: {}]
  %s1 = inlined_call_operand.hbm [shape: bf16[128,128], index: 1, kind: input, shape index: {}]
  %s2 = inlined_call_operand.vmem [shape: f32[1,128], index: 2, kind: input, shape index: {}]
  %s3 = inlined_call_operand.hbm [shape: bf16[128,128], index: 3, kind: input, shape index: {}]
  %s4 = inlined_call_operand.vmem [shape: f32[1,128], index: 4, kind: input, shape index: {}]
  %s5 = inlined_call_operand.hbm [shape: f32[16,128], index: 5, kind: output, shape index: {}]
  %s6 = sld [smem:[#allocation0]]
  $region42: #{tpu_custom_call.1} parent=0
    _
  %s8 = ssub.s32 1, %s6
  %s9 = scalar_select 0, %s8, %s6
  $region1: #{tpu_custom_call.1} parent=0
    #allocation2 [shape = 'u8[4096]{0}', space=vmem, size = 0x1000, scoped, tag = 'input window, operand 0, single buffered']
    #allocation3 [shape = 's32[1]{0}', space=sflag, size = 0x4, scoped, tag = 'scoped memory for tpu_custom_call.1']
    #allocation4 [shape = 's32[1]{0}', space=sflag, size = 0x4, scoped, tag = 'scoped memory for tpu_custom_call.1']
    #allocation5 [shape = 'u8[32768]{0}', space=vmem, size = 0x8000, scoped, tag = 'input window, operand 1, single buffered']
    #allocation6 [shape = 's32[1]{0}', space=sflag, size = 0x4, scoped, tag = 'scoped memory for tpu_custom_call.1']
    #allocation7 [shape = 'u8[32768]{0}', space=vmem, size = 0x8000, scoped, tag = 'input window, operand 3, single buffered']
    #allocation8 [shape = 'u8[8192]{0}', space=vmem, size = 0x2000, scoped, tag = 'output window, operand 0, single buffered']
    %10 = vsyncpa [#allocation3], 0
    %11 = vsyncpa [#allocation6], 0
    %12 = vsyncpa [#allocation4], 0
    // Predicated region
    $region2: #{tpu_custom_call.1} parent=1 // pred_check
      _
    $region3: #{tpu_custom_call.1} parent=1 // pred_check_branch
      %14 = sbr.rel (0) target = $region5
    $region4: #{tpu_custom_call.1} parent=1 // pred_region
      %16 = vsyncadd [#allocation3], 0
      %s17 = sshll.u32 %s0, 4
      %s18 = int_to_ptr.hbm [resolvable:$true] %s17
      %s19 = sshll.u32 [#allocation2], 4
      %s20 = int_to_ptr.vmem [resolvable:$true] %s19
      %25 = dma.hbm_to_vmem [thread:$0]  %s18, 128, %s20, [#allocation3], 64, 64, 4
    $region5: #{tpu_custom_call.1} parent=1 // pred_fallthru
      _
    // Predicated region
    $region6: #{tpu_custom_call.1} parent=1 // pred_check
      _
    $region7: #{tpu_custom_call.1} parent=1 // pred_check_branch
      %27 = sbr.rel (0) target = $region9
    $region8: #{tpu_custom_call.1} parent=1 // pred_region
      %29 = vsyncadd [#allocation6], 0
      %s30 = sshll.u32 %s1, 4
      %s31 = int_to_ptr.hbm [resolvable:$true] %s30
      %s32 = sshll.u32 [#allocation5], 4
      %s33 = int_to_ptr.vmem [resolvable:$true] %s32
      %38 = dma.hbm_to_vmem [thread:$0]  %s31, 1024, %s33, [#allocation6], 64, 64, 4
    $region9: #{tpu_custom_call.1} parent=1 // pred_fallthru
      _
    // Predicated region
    $region10: #{tpu_custom_call.1} parent=1 // pred_check
      _
    $region11: #{tpu_custom_call.1} parent=1 // pred_check_branch
      %40 = sbr.rel (0) target = $region13
    $region12: #{tpu_custom_call.1} parent=1 // pred_region
      _
    $region13: #{tpu_custom_call.1} parent=1 // pred_fallthru
      _
    // Predicated region
    $region14: #{tpu_custom_call.1} parent=1 // pred_check
      _
    $region15: #{tpu_custom_call.1} parent=1 // pred_check_branch
      %42 = sbr.rel (0) target = $region17
    $region16: #{tpu_custom_call.1} parent=1 // pred_region
      %44 = vsyncadd [#allocation6], 0
      %s45 = sshll.u32 %s3, 4
      %s46 = int_to_ptr.hbm [resolvable:$true] %s45
      %s47 = sshll.u32 [#allocation7], 4
      %s48 = int_to_ptr.vmem [resolvable:$true] %s47
      %53 = dma.hbm_to_vmem [thread:$0]  %s46, 1024, %s48, [#allocation6], 64, 64, 4
    $region17: #{tpu_custom_call.1} parent=1 // pred_fallthru
      _
    // Predicated region
    $region18: #{tpu_custom_call.1} parent=1 // pred_check
      _
    $region19: #{tpu_custom_call.1} parent=1 // pred_check_branch
      %55 = sbr.rel (0) target = $region21
    $region20: #{tpu_custom_call.1} parent=1 // pred_region
      _
    $region21: #{tpu_custom_call.1} parent=1 // pred_fallthru
      _
    // Predicated region
    $region22: #{tpu_custom_call.1} parent=1 // pred_check
      _
    $region23: #{tpu_custom_call.1} parent=1 // pred_check_branch
      %57 = sbr.rel (0) target = $region25
    $region24: #{tpu_custom_call.1} parent=1 // pred_region
      %59 = dma.done [#allocation3], 128
    $region25: #{tpu_custom_call.1} parent=1 // pred_fallthru
      _
    // Predicated region
    $region26: #{tpu_custom_call.1} parent=1 // pred_check
      _
    $region27: #{tpu_custom_call.1} parent=1 // pred_check_branch
      %61 = sbr.rel (0) target = $region29
    $region28: #{tpu_custom_call.1} parent=1 // pred_region
      %63 = dma.done [#allocation6], 1024
    $region29: #{tpu_custom_call.1} parent=1 // pred_fallthru
      _
    // Predicated region
    $region30: #{tpu_custom_call.1} parent=1 // pred_check
      _
    $region31: #{tpu_custom_call.1} parent=1 // pred_check_branch
      %65 = sbr.rel (0) target = $region33
    $region32: #{tpu_custom_call.1} parent=1 // pred_region
      %67 = dma.done [#allocation6], 1024
    $region33: #{tpu_custom_call.1} parent=1 // pred_fallthru
      _
    %v68 = vld [vmem:[#allocation2] sm:$0xf]
    %v69 = vld [vmem:[#allocation2 + $0x4] sm:$0xf]
    %v70 = vld [vmem:[#allocation5] sm:$0xf]
    %v71 = vld [vmem:[#allocation5 + $0x4] sm:$0xf]
    %v72 = vld [vmem:[#allocation5 + $0x8] sm:$0xf]
    %v73 = vld [vmem:[#allocation5 + $0xc] sm:$0xf]
    %v74 = vld [vmem:[#allocation5 + $0x10] sm:$0xf]
    %v75 = vld [vmem:[#allocation5 + $0x14] sm:$0xf]
    %v76 = vld [vmem:[#allocation5 + $0x18] sm:$0xf]
    %v77 = vld [vmem:[#allocation5 + $0x1c] sm:$0xf]
    %v78 = vld [vmem:[#allocation5 + $0x20] sm:$0xf]
    %v79 = vld [vmem:[#allocation5 + $0x24] sm:$0xf]
    %v80 = vld [vmem:[#allocation5 + $0x28] sm:$0xf]
    %v81 = vld [vmem:[#allocation5 + $0x2c] sm:$0xf]
    %v82 = vld [vmem:[#allocation5 + $0x30] sm:$0xf]
    %v83 = vld [vmem:[#allocation5 + $0x34] sm:$0xf]
    %v84 = vld [vmem:[#allocation5 + $0x38] sm:$0xf]
    %v85 = vld [vmem:[#allocation5 + $0x3c] sm:$0xf]
    %v86 = vld [vmem:[%s2] sm:$0x1]
    %v88 = vperm.slane %v86, 0
    %v92 = vunpack.c.l.b16 %v68
    %v93 = vunpack.c.l.b16 %v69
    %v94 = vpack.c.b16 %v93, %v92
    %v112 = vunpack.c.l.b16 %v70
    %v113 = vunpack.c.l.b16 %v71
    %v114 = vunpack.c.l.b16 %v72
    %v115 = vunpack.c.l.b16 %v73
    %v116 = vunpack.c.l.b16 %v74
    %v117 = vunpack.c.l.b16 %v75
    %v118 = vunpack.c.l.b16 %v76
    %v119 = vunpack.c.l.b16 %v77
    %v120 = vunpack.c.l.b16 %v78
    %v121 = vunpack.c.l.b16 %v79
    %v122 = vunpack.c.l.b16 %v80
    %v123 = vunpack.c.l.b16 %v81
    %v124 = vunpack.c.l.b16 %v82
    %v125 = vunpack.c.l.b16 %v83
    %v126 = vunpack.c.l.b16 %v84
    %v127 = vunpack.c.l.b16 %v85
    %v128 = vpack.c.b16 %v113, %v112
    %v129 = vpack.c.b16 %v115, %v114
    %v130 = vpack.c.b16 %v117, %v116
    %v131 = vpack.c.b16 %v119, %v118
    %v132 = vpack.c.b16 %v121, %v120
    %v133 = vpack.c.b16 %v123, %v122
    %v134 = vpack.c.b16 %v125, %v124
    %v135 = vpack.c.b16 %v127, %v126
    %144 = vmatpush.bf16.msra.mxu0 %v135
    %145 = vmatpush.bf16.msra.mxu0 %v134
    %146 = vmatpush.bf16.msra.mxu0 %v133
    %147 = vmatpush.bf16.msra.mxu0 %v132
    %148 = vmatpush.bf16.msra.mxu0 %v131
    %149 = vmatpush.bf16.msra.mxu0 %v130
    %150 = vmatpush.bf16.msra.mxu0 %v129
    %151 = vmatpush.bf16.msra.mxu0 %v128
    %152 = vmatmul.bf16.gmra.mxu0 %v94
    %v153 = vpop.f32.mrf.mxu0
    %v154 = vadd.f32 %v88, %v153
    %v155 = vpop.f32.mrf.mxu0
    %v156 = vadd.f32 %v88, %v155
    %157 = vdwg.mxu0
    %v158 = vmax.f32 %v154, 0.0
    %v159 = vmax.f32 %v156, 0.0
    %v160 = vpack.c.bf16 %v159, %v158
    %v161 = vld [vmem:[#allocation7] sm:$0xf]
    %v162 = vld [vmem:[#allocation7 + $0x4] sm:$0xf]
    %v163 = vld [vmem:[#allocation7 + $0x8] sm:$0xf]
    %v164 = vld [vmem:[#allocation7 + $0xc] sm:$0xf]
    %v165 = vld [vmem:[#allocation7 + $0x10] sm:$0xf]
    %v166 = vld [vmem:[#allocation7 + $0x14] sm:$0xf]
    %v167 = vld [vmem:[#allocation7 + $0x18] sm:$0xf]
    %v168 = vld [vmem:[#allocation7 + $0x1c] sm:$0xf]
    %v169 = vld [vmem:[#allocation7 + $0x20] sm:$0xf]
    %v170 = vld [vmem:[#allocation7 + $0x24] sm:$0xf]
    %v171 = vld [vmem:[#allocation7 + $0x28] sm:$0xf]
    %v172 = vld [vmem:[#allocation7 + $0x2c] sm:$0xf]
    %v173 = vld [vmem:[#allocation7 + $0x30] sm:$0xf]
    %v174 = vld [vmem:[#allocation7 + $0x34] sm:$0xf]
    %v175 = vld [vmem:[#allocation7 + $0x38] sm:$0xf]
    %v176 = vld [vmem:[#allocation7 + $0x3c] sm:$0xf]
    %v177 = vld [vmem:[%s4] sm:$0x1]
    %v179 = vperm.slane %v177, 0
    %v197 = vunpack.c.l.b16 %v161
    %v198 = vunpack.c.l.b16 %v162
    %v199 = vunpack.c.l.b16 %v163
    %v200 = vunpack.c.l.b16 %v164
    %v201 = vunpack.c.l.b16 %v165
    %v202 = vunpack.c.l.b16 %v166
    %v203 = vunpack.c.l.b16 %v167
    %v204 = vunpack.c.l.b16 %v168
    %v205 = vunpack.c.l.b16 %v169
    %v206 = vunpack.c.l.b16 %v170
    %v207 = vunpack.c.l.b16 %v171
    %v208 = vunpack.c.l.b16 %v172
    %v209 = vunpack.c.l.b16 %v173
    %v210 = vunpack.c.l.b16 %v174
    %v211 = vunpack.c.l.b16 %v175
    %v212 = vunpack.c.l.b16 %v176
    %v213 = vpack.c.b16 %v198, %v197
    %v214 = vpack.c.b16 %v200, %v199
    %v215 = vpack.c.b16 %v202, %v201
    %v216 = vpack.c.b16 %v204, %v203
    %v217 = vpack.c.b16 %v206, %v205
    %v218 = vpack.c.b16 %v208, %v207
    %v219 = vpack.c.b16 %v210, %v209
    %v220 = vpack.c.b16 %v212, %v211
    %229 = vmatpush.bf16.msra.mxu0 %v220
    %230 = vmatpush.bf16.msra.mxu0 %v219
    %231 = vmatpush.bf16.msra.mxu0 %v218
    %232 = vmatpush.bf16.msra.mxu0 %v217
    %233 = vmatpush.bf16.msra.mxu0 %v216
    %234 = vmatpush.bf16.msra.mxu0 %v215
    %235 = vmatpush.bf16.msra.mxu0 %v214
    %236 = vmatpush.bf16.msra.mxu0 %v213
    %237 = vmatmul.bf16.gmra.mxu0 %v160
    %v238 = vpop.f32.mrf.mxu0
    %v239 = vadd.f32 %v179, %v238
    %v240 = vpop.f32.mrf.mxu0
    %v241 = vadd.f32 %v179, %v240
    %242 = vdwg.mxu0
    %243 = vst [vmem:[#allocation8] sm:$0xff] %v239
    %244 = vst [vmem:[#allocation8 + $0x8] sm:$0xff] %v241
    // Predicated region
    $region34: #{tpu_custom_call.1} parent=1 // pred_check
      _
    $region35: #{tpu_custom_call.1} parent=1 // pred_check_branch
      %246 = sbr.rel (0) target = $region37
    $region36: #{tpu_custom_call.1} parent=1 // pred_region
      %248 = vsyncadd [#allocation4], 0
      %s249 = sshll.u32 [#allocation8], 4
      %s250 = int_to_ptr.vmem [resolvable:$true] %s249
      %s251 = sshll.u32 %s5, 4
      %s252 = int_to_ptr.hbm [resolvable:$true] %s251
      %257 = dma.vmem_to_hbm [thread:$0]  %s250, 256, %s252, [#allocation4], 128, 128, 8
    $region37: #{tpu_custom_call.1} parent=1 // pred_fallthru
      _
    // Predicated region
    $region38: #{tpu_custom_call.1} parent=1 // pred_check
      _
    $region39: #{tpu_custom_call.1} parent=1 // pred_check_branch
      %259 = sbr.rel (0) target = $region41
    $region40: #{tpu_custom_call.1} parent=1 // pred_region
      %261 = dma.done [#allocation4], 256
    $region41: #{tpu_custom_call.1} parent=1 // pred_fallthru
      _
    %262 = vsyncpa [#allocation3], 1
    %263 = vsyncpa [#allocation6], 1
    %264 = vsyncpa [#allocation4], 1

// kernel: tpu_custom_call.1
$region0: #{tpu_custom_call.1}
  #allocation0 [shape = 'u32[]', space=smem, size = 0x4, offset = 0x4, fixed_abs, tag = 'smem constant byte address 0x4 - core index']
  #allocation1 [shape = 'u32[72,128]{1,0:T(1,128)}', space=vmem, size = 0x9000, scoped, tag = 'internal scratch']
  %s0 = inlined_call_operand.hbm [shape: bf16[16,128], index: 0, kind: input, shape index: {}]
  %s1 = inlined_call_operand.hbm [shape: bf16[128,128], index: 1, kind: input, shape index: {}]
  %s2 = inlined_call_operand.vmem [shape: f32[1,128], index: 2, kind: input, shape index: {}]
  %s3 = inlined_call_operand.hbm [shape: bf16[128,128], index: 3, kind: input, shape index: {}]
  %s4 = inlined_call_operand.vmem [shape: f32[1,128], index: 4, kind: input, shape index: {}]
  %s5 = inlined_call_operand.hbm [shape: f32[16,128], index: 5, kind: output, shape index: {}]
  %s6 = sld [smem:[#allocation0]]
  $region42: #{tpu_custom_call.1} parent=0
    _
  %s8 = ssub.s32 1, %s6
  %s9 = scalar_select 0, %s8, %s6
  $region1: #{tpu_custom_call.1} parent=0
    #allocation2 [shape = 'u8[4096]{0}', space=vmem, size = 0x1000, scoped, tag = 'input window, operand 0, single buffered']
    #allocation3 [shape = 's32[1]{0}', space=sflag, size = 0x4, scoped, tag = 'scoped memory for tpu_custom_call.1']
    #allocation4 [shape = 's32[1]{0}', space=sflag, size = 0x4, scoped, tag = 'scoped memory for tpu_custom_call.1']
    #allocation5 [shape = 'u8[32768]{0}', space=vmem, size = 0x8000, scoped, tag = 'input window, operand 1, single buffered']
    #allocation6 [shape = 's32[1]{0}', space=sflag, size = 0x4, scoped, tag = 'scoped memory for tpu_custom_call.1']
    #allocation7 [shape = 'u8[32768]{0}', space=vmem, size = 0x8000, scoped, tag = 'input window, operand 3, single buffered']
    #allocation8 [shape = 'u8[8192]{0}', space=vmem, size = 0x2000, scoped, tag = 'output window, operand 0, single buffered']
    %10 = vsyncpa [#allocation3], 0
    %11 = vsyncpa [#allocation6], 0
    %12 = vsyncpa [#allocation4], 0
    // Predicated region
    $region2: #{tpu_custom_call.1} parent=1 // pred_check
      _
    $region3: #{tpu_custom_call.1} parent=1 // pred_check_branch
      %14 = sbr.rel (0) target = $region5
    $region4: #{tpu_custom_call.1} parent=1 // pred_region
      %16 = vsyncadd [#allocation3], 0
      %s17 = sshll.u32 %s0, 4
      %s18 = int_to_ptr.hbm [resolvable:$true] %s17
      %s19 = sshll.u32 [#allocation2], 4
      %s20 = int_to_ptr.vmem [resolvable:$true] %s19
      %25 = dma.hbm_to_vmem [thread:$0]  %s18, 128, %s20, [#allocation3], 64, 64, 4
    $region5: #{tpu_custom_call.1} parent=1 // pred_fallthru
      _
    // Predicated region
    $region6: #{tpu_custom_call.1} parent=1 // pred_check
      _
    $region7: #{tpu_custom_call.1} parent=1 // pred_check_branch
      %27 = sbr.rel (0) target = $region9
    $region8: #{tpu_custom_call.1} parent=1 // pred_region
      %29 = vsyncadd [#allocation6], 0
      %s30 = sshll.u32 %s1, 4
      %s31 = int_to_ptr.hbm [resolvable:$true] %s30
      %s32 = sshll.u32 [#allocation5], 4
      %s33 = int_to_ptr.vmem [resolvable:$true] %s32
      %38 = dma.hbm_to_vmem [thread:$0]  %s31, 1024, %s33, [#allocation6], 64, 64, 4
    $region9: #{tpu_custom_call.1} parent=1 // pred_fallthru
      _
    // Predicated region
    $region10: #{tpu_custom_call.1} parent=1 // pred_check
      _
    $region11: #{tpu_custom_call.1} parent=1 // pred_check_branch
      %40 = sbr.rel (0) target = $region13
    $region12: #{tpu_custom_call.1} parent=1 // pred_region
      _
    $region13: #{tpu_custom_call.1} parent=1 // pred_fallthru
      _
    // Predicated region
    $region14: #{tpu_custom_call.1} parent=1 // pred_check
      _
    $region15: #{tpu_custom_call.1} parent=1 // pred_check_branch
      %42 = sbr.rel (0) target = $region17
    $region16: #{tpu_custom_call.1} parent=1 // pred_region
      %44 = vsyncadd [#allocation6], 0
      %s45 = sshll.u32 %s3, 4
      %s46 = int_to_ptr.hbm [resolvable:$true] %s45
      %s47 = sshll.u32 [#allocation7], 4
      %s48 = int_to_ptr.vmem [resolvable:$true] %s47
      %53 = dma.hbm_to_vmem [thread:$0]  %s46, 1024, %s48, [#allocation6], 64, 64, 4
    $region17: #{tpu_custom_call.1} parent=1 // pred_fallthru
      _
    // Predicated region
    $region18: #{tpu_custom_call.1} parent=1 // pred_check
      _
    $region19: #{tpu_custom_call.1} parent=1 // pred_check_branch
      %55 = sbr.rel (0) target = $region21
    $region20: #{tpu_custom_call.1} parent=1 // pred_region
      _
    $region21: #{tpu_custom_call.1} parent=1 // pred_fallthru
      _
    // Predicated region
    $region22: #{tpu_custom_call.1} parent=1 // pred_check
      _
    $region23: #{tpu_custom_call.1} parent=1 // pred_check_branch
      %57 = sbr.rel (0) target = $region25
    $region24: #{tpu_custom_call.1} parent=1 // pred_region
      %59 = dma.done [#allocation3], 128
    $region25: #{tpu_custom_call.1} parent=1 // pred_fallthru
      _
    // Predicated region
    $region26: #{tpu_custom_call.1} parent=1 // pred_check
      _
    $region27: #{tpu_custom_call.1} parent=1 // pred_check_branch
      %61 = sbr.rel (0) target = $region29
    $region28: #{tpu_custom_call.1} parent=1 // pred_region
      %63 = dma.done [#allocation6], 1024
    $region29: #{tpu_custom_call.1} parent=1 // pred_fallthru
      _
    // Predicated region
    $region30: #{tpu_custom_call.1} parent=1 // pred_check
      _
    $region31: #{tpu_custom_call.1} parent=1 // pred_check_branch
      %65 = sbr.rel (0) target = $region33
    $region32: #{tpu_custom_call.1} parent=1 // pred_region
      %67 = dma.done [#allocation6], 1024
    $region33: #{tpu_custom_call.1} parent=1 // pred_fallthru
      _
    %v68 = vld [vmem:[#allocation2] sm:$0xf]
    %v69 = vld [vmem:[#allocation2 + $0x4] sm:$0xf]
    %v70 = vld [vmem:[#allocation5] sm:$0xf]
    %v71 = vld [vmem:[#allocation5 + $0x4] sm:$0xf]
    %v72 = vld [vmem:[#allocation5 + $0x8] sm:$0xf]
    %v73 = vld [vmem:[#allocation5 + $0xc] sm:$0xf]
    %v74 = vld [vmem:[#allocation5 + $0x10] sm:$0xf]
    %v75 = vld [vmem:[#allocation5 + $0x14] sm:$0xf]
    %v76 = vld [vmem:[#allocation5 + $0x18] sm:$0xf]
    %v77 = vld [vmem:[#allocation5 + $0x1c] sm:$0xf]
    %v78 = vld [vmem:[#allocation5 + $0x20] sm:$0xf]
    %v79 = vld [vmem:[#allocation5 + $0x24] sm:$0xf]
    %v80 = vld [vmem:[#allocation5 + $0x28] sm:$0xf]
    %v81 = vld [vmem:[#allocation5 + $0x2c] sm:$0xf]
    %v82 = vld [vmem:[#allocation5 + $0x30] sm:$0xf]
    %v83 = vld [vmem:[#allocation5 + $0x34] sm:$0xf]
    %v84 = vld [vmem:[#allocation5 + $0x38] sm:$0xf]
    %v85 = vld [vmem:[#allocation5 + $0x3c] sm:$0xf]
    %v86 = vld [vmem:[%s2] sm:$0x1]
    %v88 = vperm.slane %v86, 0
    %v92 = vunpack.c.l.b16 %v68
    %v93 = vunpack.c.l.b16 %v69
    %v94 = vpack.c.b16 %v93, %v92
    %v112 = vunpack.c.l.b16 %v70
    %v113 = vunpack.c.l.b16 %v71
    %v114 = vunpack.c.l.b16 %v72
    %v115 = vunpack.c.l.b16 %v73
    %v116 = vunpack.c.l.b16 %v74
    %v117 = vunpack.c.l.b16 %v75
    %v118 = vunpack.c.l.b16 %v76
    %v119 = vunpack.c.l.b16 %v77
    %v120 = vunpack.c.l.b16 %v78
    %v121 = vunpack.c.l.b16 %v79
    %v122 = vunpack.c.l.b16 %v80
    %v123 = vunpack.c.l.b16 %v81
    %v124 = vunpack.c.l.b16 %v82
    %v125 = vunpack.c.l.b16 %v83
    %v126 = vunpack.c.l.b16 %v84
    %v127 = vunpack.c.l.b16 %v85
    %v128 = vpack.c.b16 %v113, %v112
    %v129 = vpack.c.b16 %v115, %v114
    %v130 = vpack.c.b16 %v117, %v116
    %v131 = vpack.c.b16 %v119, %v118
    %v132 = vpack.c.b16 %v121, %v120
    %v133 = vpack.c.b16 %v123, %v122
    %v134 = vpack.c.b16 %v125, %v124
    %v135 = vpack.c.b16 %v127, %v126
    %144 = vmatpush.bf16.msra.mxu0 %v135
    %145 = vmatpush.bf16.msra.mxu0 %v134
    %146 = vmatpush.bf16.msra.mxu0 %v133
    %147 = vmatpush.bf16.msra.mxu0 %v132
    %148 = vmatpush.bf16.msra.mxu0 %v131
    %149 = vmatpush.bf16.msra.mxu0 %v130
    %150 = vmatpush.bf16.msra.mxu0 %v129
    %151 = vmatpush.bf16.msra.mxu0 %v128
    %152 = vmatmul.bf16.gmra.mxu0 %v94
    %v153 = vpop.f32.mrf.mxu0
    %v154 = vadd.f32 %v88, %v153
    %v155 = vpop.f32.mrf.mxu0
    %v156 = vadd.f32 %v88, %v155
    %157 = vdwg.mxu0
    %v158 = vmax.f32 %v154, 0.0
    %v159 = vmax.f32 %v156, 0.0
    %v160 = vpack.c.bf16 %v159, %v158
    %v161 = vld [vmem:[#allocation7] sm:$0xf]
    %v162 = vld [vmem:[#allocation7 + $0x4] sm:$0xf]
    %v163 = vld [vmem:[#allocation7 + $0x8] sm:$0xf]
    %v164 = vld [vmem:[#allocation7 + $0xc] sm:$0xf]
    %v165 = vld [vmem:[#allocation7 + $0x10] sm:$0xf]
    %v166 = vld [vmem:[#allocation7 + $0x14] sm:$0xf]
    %v167 = vld [vmem:[#allocation7 + $0x18] sm:$0xf]
    %v168 = vld [vmem:[#allocation7 + $0x1c] sm:$0xf]
    %v169 = vld [vmem:[#allocation7 + $0x20] sm:$0xf]
    %v170 = vld [vmem:[#allocation7 + $0x24] sm:$0xf]
    %v171 = vld [vmem:[#allocation7 + $0x28] sm:$0xf]
    %v172 = vld [vmem:[#allocation7 + $0x2c] sm:$0xf]
    %v173 = vld [vmem:[#allocation7 + $0x30] sm:$0xf]
    %v174 = vld [vmem:[#allocation7 + $0x34] sm:$0xf]
    %v175 = vld [vmem:[#allocation7 + $0x38] sm:$0xf]
    %v176 = vld [vmem:[#allocation7 + $0x3c] sm:$0xf]
    %v177 = vld [vmem:[%s4] sm:$0x1]
    %v179 = vperm.slane %v177, 0
    %v197 = vunpack.c.l.b16 %v161
    %v198 = vunpack.c.l.b16 %v162
    %v199 = vunpack.c.l.b16 %v163
    %v200 = vunpack.c.l.b16 %v164
    %v201 = vunpack.c.l.b16 %v165
    %v202 = vunpack.c.l.b16 %v166
    %v203 = vunpack.c.l.b16 %v167
    %v204 = vunpack.c.l.b16 %v168
    %v205 = vunpack.c.l.b16 %v169
    %v206 = vunpack.c.l.b16 %v170
    %v207 = vunpack.c.l.b16 %v171
    %v208 = vunpack.c.l.b16 %v172
    %v209 = vunpack.c.l.b16 %v173
    %v210 = vunpack.c.l.b16 %v174
    %v211 = vunpack.c.l.b16 %v175
    %v212 = vunpack.c.l.b16 %v176
    %v213 = vpack.c.b16 %v198, %v197
    %v214 = vpack.c.b16 %v200, %v199
    %v215 = vpack.c.b16 %v202, %v201
    %v216 = vpack.c.b16 %v204, %v203
    %v217 = vpack.c.b16 %v206, %v205
    %v218 = vpack.c.b16 %v208, %v207
    %v219 = vpack.c.b16 %v210, %v209
    %v220 = vpack.c.b16 %v212, %v211
    %229 = vmatpush.bf16.msra.mxu0 %v220
    %230 = vmatpush.bf16.msra.mxu0 %v219
    %231 = vmatpush.bf16.msra.mxu0 %v218
    %232 = vmatpush.bf16.msra.mxu0 %v217
    %233 = vmatpush.bf16.msra.mxu0 %v216
    %234 = vmatpush.bf16.msra.mxu0 %v215
    %235 = vmatpush.bf16.msra.mxu0 %v214
    %236 = vmatpush.bf16.msra.mxu0 %v213
    %237 = vmatmul.bf16.gmra.mxu0 %v160
    %v238 = vpop.f32.mrf.mxu0
    %v239 = vadd.f32 %v179, %v238
    %v240 = vpop.f32.mrf.mxu0
    %v241 = vadd.f32 %v179, %v240
    %242 = vdwg.mxu0
    %243 = vst [vmem:[#allocation8] sm:$0xff] %v239
    %244 = vst [vmem:[#allocation8 + $0x8] sm:$0xff] %v241
    // Predicated region
    $region34: #{tpu_custom_call.1} parent=1 // pred_check
      _
    $region35: #{tpu_custom_call.1} parent=1 // pred_check_branch
      %246 = sbr.rel (0) target = $region37
    $region36: #{tpu_custom_call.1} parent=1 // pred_region
      %248 = vsyncadd [#allocation4], 0
      %s249 = sshll.u32 [#allocation8], 4
      %s250 = int_to_ptr.vmem [resolvable:$true] %s249
      %s251 = sshll.u32 %s5, 4
      %s252 = int_to_ptr.hbm [resolvable:$true] %s251
      %257 = dma.vmem_to_hbm [thread:$0]  %s250, 256, %s252, [#allocation4], 128, 128, 8
    $region37: #{tpu_custom_call.1} parent=1 // pred_fallthru
      _
    // Predicated region
    $region38: #{tpu_custom_call.1} parent=1 // pred_check
      _
    $region39: #{tpu_custom_call.1} parent=1 // pred_check_branch
      %259 = sbr.rel (0) target = $region41
    $region40: #{tpu_custom_call.1} parent=1 // pred_region
      %261 = dma.done [#allocation4], 256
    $region41: #{tpu_custom_call.1} parent=1 // pred_fallthru
      _
    %262 = vsyncpa [#allocation3], 1
    %263 = vsyncpa [#allocation6], 1
    %264 = vsyncpa [#allocation4], 1

</llo_original>
